<compile_context>
chip_gen: v7x
topology: tpu7x:2x2x1
jax: 0.10.0
libtpu: 0.0.40
codegen_flags: <defaults>
</compile_context>

<pallas_src>
import functools
import math
from fractions import Fraction
from math import factorial

import numpy as np

import jax
import jax.numpy as jnp
from jax.experimental import pallas as pl
from jax.experimental.pallas import tpu as pltpu


_MXU_DTYPE = jnp.bfloat16            # bf16 MXU operands, f32 accumulation
_EDGE_VMEM_LIMIT = 64 * 1024 * 1024  # safe on v5e/v6e/v7x; raise on v6e if needed


# ----------------------------------------------------------------------------
# activation 2nd-moment normalization constants (e3nn normalize2mom)
# ----------------------------------------------------------------------------
def _normalize2mom(f):
    z = np.linspace(-8.0, 8.0, 20001)
    w = np.exp(-0.5 * z * z) / math.sqrt(2.0 * math.pi)
    m2 = float(np.sum(f(z) ** 2 * w) * (z[1] - z[0]))
    return float(1.0 / math.sqrt(m2))


C_SILU = _normalize2mom(lambda z: z / (1.0 + np.exp(-z)))
C_TANH = _normalize2mom(np.tanh)
C_SIGMOID = _normalize2mom(lambda z: 1.0 / (1.0 + np.exp(-z)))


# ----------------------------------------------------------------------------
# irreps helpers (init-time, numpy / python)
# ----------------------------------------------------------------------------
def irreps_dim(irreps):
    return sum(mul * (2 * ir[0] + 1) for mul, ir in irreps)


def irreps_slices(irreps):
    out, off = [], 0
    for mul, ir in irreps:
        out.append((off, mul, ir))
        off += mul * (2 * ir[0] + 1)
    return out


def ir_prod(ir1, ir2):
    (l1, p1), (l2, p2) = ir1, ir2
    return [(l, p1 * p2) for l in range(abs(l1 - l2), l1 + l2 + 1)]


def tp_path_exists(irreps1, irreps2, ir_out):
    for _, ir1 in irreps1:
        for _, ir2 in irreps2:
            if tuple(ir_out) in ir_prod(ir1, ir2):
                return True
    return False


def _ir_sort_key(ir):
    l, p = ir
    return (l, -p * (-1) ** l)


# ----------------------------------------------------------------------------
# real Wigner 3j (e3nn: su2 CG formula + real<->complex basis change)
# ----------------------------------------------------------------------------
def _su2_cg(j1, j2, j3, m1, m2, m3):
    if m3 != m1 + m2:
        return 0.0
    vmin = int(max(-j1 + j2 + m3, -j1 + m1, 0))
    vmax = int(min(j2 + j3 + m1, j3 - j1 + j2, j3 + m3))

    def f(n):
        return factorial(round(n))

    pref = ((2.0 * j3 + 1.0) * Fraction(
        f(j3 + j1 - j2) * f(j3 - j1 + j2) * f(j1 + j2 - j3) * f(j3 + m3) * f(j3 - m3),
        f(j1 + j2 + j3 + 1) * f(j1 - m1) * f(j1 + m1) * f(j2 - m2) * f(j2 + m2))) ** 0.5
    s = 0
    for v in range(vmin, vmax + 1):
        s += (-1) ** int(v + j2 + m2) * Fraction(
            f(j2 + j3 + m1 - v) * f(j1 - m1 + v),
            f(v) * f(j3 - j1 + j2 - v) * f(j3 + m3 - v) * f(v + j1 - j2 - m3))
    return float(pref * s)


def _su2_clebsch_gordan(l1, l2, l3):
    mat = np.zeros((2 * l1 + 1, 2 * l2 + 1, 2 * l3 + 1))
    if abs(l1 - l2) <= l3 <= l1 + l2:
        for m1 in range(-l1, l1 + 1):
            for m2 in range(-l2, l2 + 1):
                if abs(m1 + m2) <= l3:
                    mat[l1 + m1, l2 + m2, l3 + m1 + m2] = _su2_cg(l1, l2, l3, m1, m2, m1 + m2)
    return mat


def _change_basis_real_to_complex(l):
    q = np.zeros((2 * l + 1, 2 * l + 1), dtype=np.complex128)
    for m in range(-l, 0):
        q[l + m, l + abs(m)] = 1.0 / 2 ** 0.5
        q[l + m, l - abs(m)] = -1j / 2 ** 0.5
    q[l, l] = 1.0
    for m in range(1, l + 1):
        q[l + m, l + abs(m)] = (-1) ** m / 2 ** 0.5
        q[l + m, l - abs(m)] = 1j * (-1) ** m / 2 ** 0.5
    return (-1j) ** l * q


@functools.lru_cache(maxsize=None)
def real_wigner_3j(l1, l2, l3):
    C = _su2_clebsch_gordan(l1, l2, l3).astype(np.complex128)
    Q1 = _change_basis_real_to_complex(l1)
    Q2 = _change_basis_real_to_complex(l2)
    Q3 = _change_basis_real_to_complex(l3)
    C = np.einsum('ij,kl,mn,ikn->jlm', Q1, Q2, np.conj(Q3.T), C)
    C = np.real(C)
    n = np.linalg.norm(C)
    return (C / n if n > 1e-12 else C).astype(np.float32)


# ----------------------------------------------------------------------------
# padding / tiling helpers
# ----------------------------------------------------------------------------
def _round_up(n, m):
    return ((n + m - 1) // m) * m


def _pad_rows(a, n_pad):
    n = a.shape[0]
    if n == n_pad:
        return a
    pad = [(0, n_pad - n)] + [(0, 0)] * (a.ndim - 1)
    return jnp.pad(a, pad)


def _pad_and_tile(n, max_tile):
    max_tile = max(8, (int(max_tile) // 8) * 8)
    if n <= max_tile:
        n_pad = _round_up(max(n, 1), 8)
        return n_pad, n_pad
    return _round_up(n, max_tile), max_tile


# ----------------------------------------------------------------------------
# Pallas kernels
# ----------------------------------------------------------------------------
def _node_prep_kernel(x_ref, attr_ref, w_ref, sc_ref, x1_ref):
    """Self-connection FCTP + lin1 FCTP fused into one big-K matmul."""
    x = x_ref[...]
    attr = attr_ref[...]
    a_mul = attr.shape[1]
    d_out = sc_ref.shape[1]
    xa = jnp.concatenate([attr[:, a:a + 1] * x for a in range(a_mul)], axis=1)
    res = jnp.dot(xa.astype(w_ref.dtype), w_ref[...],
                  preferred_element_type=jnp.float32)
    sc_ref[...] = res[:, :d_out]
    x1_ref[...] = res[:, d_out:].astype(x1_ref.dtype)


@functools.lru_cache(maxsize=None)
def _node_prep_call(n_pad, tn, d_in, a_mul, d_out):
    f = pl.pallas_call(
        _node_prep_kernel,
        out_shape=(jax.ShapeDtypeStruct((n_pad, d_out), jnp.float32),
                   jax.ShapeDtypeStruct((n_pad, d_in), _MXU_DTYPE)),
        grid=(n_pad // tn,),
        in_specs=[pl.BlockSpec((tn, d_in), lambda i: (i, 0)),
                  pl.BlockSpec((tn, a_mul), lambda i: (i, 0)),
                  pl.BlockSpec((a_mul * d_in, d_out + d_in), lambda i: (0, 0))],
        out_specs=(pl.BlockSpec((tn, d_out), lambda i: (i, 0)),
                   pl.BlockSpec((tn, d_in), lambda i: (i, 0))),
        compiler_params=pltpu.CompilerParams(dimension_semantics=("parallel",)),
    )
    return jax.jit(f)


def _edge_conv_kernel(src_ref, dstr_ref, ea_ref, emb_ref, x1_ref,
                      w1_ref, w2_ref, q_ref, out_ref):
    te = src_ref.shape[0]
    n_pad = x1_ref.shape[0]
    d_edge = ea_ref.shape[1]

    @pl.when(pl.program_id(1) == 0)
    def _init():
        out_ref[...] = jnp.zeros_like(out_ref)

    src = src_ref[...]                                  # [TE, 1] int32
    dst_row = dstr_ref[0]                               # [1, TE] int32
    oh_src = (jax.lax.broadcasted_iota(jnp.int32, (te, n_pad), 1)
              == src).astype(_MXU_DTYPE)                # [TE, N] bf16 (exact 0/1)
    oh_dst_t = (jax.lax.broadcasted_iota(jnp.int32, (n_pad, te), 0)
                == dst_row).astype(_MXU_DTYPE)          # [N, TE] bf16

    # radial MLP (cosine basis embedding precomputed outside the layer loop;
    # padded edges have all-zero embedding rows -> zero messages)
    t = jnp.dot(emb_ref[...].astype(_MXU_DTYPE), w1_ref[...],
                preferred_element_type=jnp.float32)
    hact = C_SILU * t * jax.nn.sigmoid(t)
    wexp = jnp.dot(hact.astype(_MXU_DTYPE), w2_ref[...],
                   preferred_element_type=jnp.float32)  # [TE, d_mid_p]

    # gather source-node features (bf16 one-hot, f32 accumulation)
    x_src = jnp.dot(oh_src, x1_ref[...], preferred_element_type=jnp.float32)

    # factorized 'uvu' weighted TP as ONE big-K matmul:
    #   z = concat_b(edge_attr_b * x_src)   (TE, d_edge*d_in)
    ea = ea_ref[...]
    z = jnp.concatenate([ea[:, b:b + 1] * x_src for b in range(d_edge)], axis=1)
    msg = jnp.dot(z.astype(_MXU_DTYPE), q_ref[...],
                  preferred_element_type=jnp.float32)
    msg = (msg * wexp).astype(_MXU_DTYPE)

    # scatter-add onto destination nodes (VMEM-resident per-core accumulator)
    out_ref[...] += jnp.dot(oh_dst_t, msg,
                            preferred_element_type=jnp.float32)[None]


@functools.lru_cache(maxsize=None)
def _edge_conv_call(te, tiles_per, splits, n_pad, d_edge, d_in, d_mid_p, nb, hidden):
    f = pl.pallas_call(
        _edge_conv_kernel,
        out_shape=jax.ShapeDtypeStruct((splits, n_pad, d_mid_p), jnp.float32),
        grid=(splits, tiles_per),
        in_specs=[pl.BlockSpec((te, 1), lambda c, i: (c * tiles_per + i, 0)),
                  pl.BlockSpec((1, 1, te), lambda c, i: (c * tiles_per + i, 0, 0)),
                  pl.BlockSpec((te, d_edge), lambda c, i: (c * tiles_per + i, 0)),
                  pl.BlockSpec((te, nb), lambda c, i: (c * tiles_per + i, 0)),
                  pl.BlockSpec((n_pad, d_in), lambda c, i: (0, 0)),
                  pl.BlockSpec((nb, hidden), lambda c, i: (0, 0)),
                  pl.BlockSpec((hidden, d_mid_p), lambda c, i: (0, 0)),
                  pl.BlockSpec((d_edge * d_in, d_mid_p), lambda c, i: (0, 0))],
        out_specs=pl.BlockSpec((1, n_pad, d_mid_p), lambda c, i: (c, 0, 0)),
        compiler_params=pltpu.CompilerParams(
            dimension_semantics=("parallel", "arbitrary"),
            vmem_limit_bytes=_EDGE_VMEM_LIMIT),
    )
    return jax.jit(f)


def _combine_core(nm_ref, attr_ref, sc_ref, w_ref, mask_ref):
    splits = nm_ref.shape[0]
    nm = nm_ref[0]
    for s in range(1, splits):
        nm = nm + nm_ref[s]
    attr = attr_ref[...]
    a_mul = attr.shape[1]
    d_out = sc_ref.shape[1]
    na = jnp.concatenate([attr[:, a:a + 1] * nm for a in range(a_mul)], axis=1)
    acc = jnp.dot(na.astype(w_ref.dtype), w_ref[...],
                  preferred_element_type=jnp.float32)
    conv = acc[:, :d_out]
    alpha = acc[:, d_out:d_out + 1]
    mask = mask_ref[...]
    return sc_ref[...] + ((1.0 - mask) + alpha * mask) * conv


def _combine_kernel(nm_ref, attr_ref, sc_ref, w_ref, mask_ref, o_ref):
    o_ref[...] = _combine_core(nm_ref, attr_ref, sc_ref, w_ref, mask_ref)


def _combine_gate_kernel(nm_ref, attr_ref, sc_ref, w_ref, mask_ref, smask_ref,
                         eg_ref, o_ref, *, ds, ng):
    y = _combine_core(nm_ref, attr_ref, sc_ref, w_ref, mask_ref)
    s = y[:, :ds]
    g = y[:, ds:ds + ng]
    v = y[:, ds + ng:]
    s_act = jnp.where(smask_ref[...] > 0.5,
                      C_SILU * s * jax.nn.sigmoid(s),
                      C_TANH * jnp.tanh(s))
    g_act = C_SIGMOID * jax.nn.sigmoid(g)
    g_exp = jnp.dot(g_act, eg_ref[...], preferred_element_type=jnp.float32)
    o_ref[:, :ds] = s_act
    o_ref[:, ds:] = v * g_exp


@functools.lru_cache(maxsize=None)
def _combine_call(n_pad, tn, splits, d_mid_p, a_mul, d_out):
    f = pl.pallas_call(
        _combine_kernel,
        out_shape=jax.ShapeDtypeStruct((n_pad, d_out), jnp.float32),
        grid=(n_pad // tn,),
        in_specs=[pl.BlockSpec((splits, tn, d_mid_p), lambda i: (0, i, 0)),
                  pl.BlockSpec((tn, a_mul), lambda i: (i, 0)),
                  pl.BlockSpec((tn, d_out), lambda i: (i, 0)),
                  pl.BlockSpec((a_mul * d_mid_p, d_out + 1), lambda i: (0, 0)),
                  pl.BlockSpec((1, d_out), lambda i: (0, 0))],
        out_specs=pl.BlockSpec((tn, d_out), lambda i: (i, 0)),
        compiler_params=pltpu.CompilerParams(dimension_semantics=("parallel",)),
    )
    return jax.jit(f)


@functools.lru_cache(maxsize=None)
def _combine_gate_call(n_pad, tn, splits, d_mid_p, a_mul, d_out, ds, ng, dg):
    kern = functools.partial(_combine_gate_kernel, ds=ds, ng=ng)
    f = pl.pallas_call(
        kern,
        out_shape=jax.ShapeDtypeStruct((n_pad, ds + dg), jnp.float32),
        grid=(n_pad // tn,),
        in_specs=[pl.BlockSpec((splits, tn, d_mid_p), lambda i: (0, i, 0)),
                  pl.BlockSpec((tn, a_mul), lambda i: (i, 0)),
                  pl.BlockSpec((tn, d_out), lambda i: (i, 0)),
                  pl.BlockSpec((a_mul * d_mid_p, d_out + 1), lambda i: (0, 0)),
                  pl.BlockSpec((1, d_out), lambda i: (0, 0)),
                  pl.BlockSpec((1, ds), lambda i: (0, 0)),
                  pl.BlockSpec((ng, dg), lambda i: (0, 0))],
        out_specs=pl.BlockSpec((tn, ds + dg), lambda i: (i, 0)),
        compiler_params=pltpu.CompilerParams(dimension_semantics=("parallel",)),
    )
    return jax.jit(f)


def _pool_kernel(batchr_ref, x_ref, out_ref, *, inv_sqrt_nodes):
    @pl.when(pl.program_id(0) == 0)
    def _init():
        out_ref[...] = jnp.zeros_like(out_ref)

    b_row = batchr_ref[0]                 # [1, TN] int32
    n_graphs = out_ref.shape[0]
    tn = x_ref.shape[0]
    oh_t = (jax.lax.broadcasted_iota(jnp.int32, (n_graphs, tn), 0)
            == b_row).astype(jnp.float32)
    out_ref[...] += inv_sqrt_nodes * jnp.dot(oh_t, x_ref[...],
                                             preferred_element_type=jnp.float32)


@functools.lru_cache(maxsize=None)
def _pool_call(n_pad, tn, d, n_graphs, inv_sqrt_nodes):
    kern = functools.partial(_pool_kernel, inv_sqrt_nodes=inv_sqrt_nodes)
    f = pl.pallas_call(
        kern,
        out_shape=jax.ShapeDtypeStruct((n_graphs, d), jnp.float32),
        grid=(n_pad // tn,),
        in_specs=[pl.BlockSpec((1, 1, tn), lambda i: (i, 0, 0)),
                  pl.BlockSpec((tn, d), lambda i: (i, 0))],
        out_specs=pl.BlockSpec((n_graphs, d), lambda i: (0, 0)),
        compiler_params=pltpu.CompilerParams(dimension_semantics=("arbitrary",)),
    )
    return jax.jit(f)


def pool_nodes(batch, x, num_graphs, num_nodes, node_tile=256):
    n = x.shape[0]
    n_pad, tn = _pad_and_tile(n, node_tile)
    x_p = _pad_rows(jnp.asarray(x, jnp.float32), n_pad)
    batch_row = _pad_rows(jnp.asarray(batch, jnp.int32), n_pad).reshape(n_pad // tn, 1, tn)
    return _pool_call(n_pad, tn, x_p.shape[1], int(num_graphs),
                      float(1.0 / math.sqrt(num_nodes)))(batch_row, x_p)


# ----------------------------------------------------------------------------
# parameter construction (deterministic, numpy)
# ----------------------------------------------------------------------------
def build_fctp(rng, irreps_in, attr_mul, irreps_out):
    """FullyConnectedTensorProduct(irreps_in, 'Ax0e', irreps_out) as a dense matrix
    acting on flatten(x outer attr) with index p*A + a.  Returns (W, output_mask)."""
    d_in, d_out, A = irreps_dim(irreps_in), irreps_dim(irreps_out), attr_mul
    W = np.zeros((d_in * A, d_out), np.float32)
    mask = np.zeros((1, d_out), np.float32)
    in_sl, out_sl = irreps_slices(irreps_in), irreps_slices(irreps_out)
    for (oo, mo, iro) in out_sl:
        dim_ir = 2 * iro[0] + 1
        matches = [(io, mi, iri) for (io, mi, iri) in in_sl if iri == iro]
        if not matches:
            continue
        mask[0, oo:oo + mo * dim_ir] = 1.0
        fan = sum(mi for _, mi, _ in matches) * A
        a = 1.0 / math.sqrt(fan)
        for (io, mi, _) in matches:
            w = rng.standard_normal((mi, A, mo)).astype(np.float32)
            for u in range(mi):
                for aa in range(A):
                    for wo in range(mo):
                        for m in range(dim_ir):
                            row = (io + u * dim_ir + m) * A + aa
                            col = oo + wo * dim_ir + m
                            W[row, col] += a * w[u, aa, wo]
    return W, mask


def build_conv(rng, irreps_in, attr_mul, irreps_edge, irreps_out, num_basis,
               fc_hidden, num_neighbors):
    d_in = irreps_dim(irreps_in)
    d_edge = irreps_dim(irreps_edge)
    d_out = irreps_dim(irreps_out)
    A = attr_mul
    W_sc, mask_sc = build_fctp(rng, irreps_in, A, irreps_out)
    W_lin1, _ = build_fctp(rng, irreps_in, A, irreps_in)

    # 'uvu' instructions (as in e3nn points_convolution.Convolution)
    mid_raw, instr = [], []
    for i, (mul_i, ir_i) in enumerate(irreps_in):
        for j, (mul_j, ir_j) in enumerate(irreps_edge):
            assert mul_j == 1  # TODO(synk): only mul-1 edge irreps supported in this factorized TP
            for ir_o in ir_prod(ir_i, ir_j):
                if any(ir_o == ir for _, ir in irreps_out) or ir_o == (0, 1):
                    instr.append((i, j, len(mid_raw)))
                    mid_raw.append((mul_i, ir_o))
    order = sorted(range(len(mid_raw)), key=lambda k: _ir_sort_key(mid_raw[k][1]))
    perm = [0] * len(mid_raw)
    for new, old in enumerate(order):
        perm[old] = new
    irreps_mid = [mid_raw[old] for old in order]
    mid_sl = irreps_slices(irreps_mid)
    in_sl = irreps_slices(irreps_in)
    edge_sl = irreps_slices(irreps_edge)
    d_mid = irreps_dim(irreps_mid)

    weight_numel, w_off = 0, []
    for (i, j, k) in instr:
        w_off.append(weight_numel)
        weight_numel += irreps_in[i][0]

    Q = np.zeros((d_in * d_edge, d_mid), np.float32)
    widx = np.zeros((d_mid,), np.int32)
    for t, (i, j, k) in enumerate(instr):
        si, mul, ir_i = in_sl[i]
        sj, _, ir_j = edge_sl[j]
        so, _, ir_o = mid_sl[perm[k]]
        l1, l2, l3 = ir_i[0], ir_j[0], ir_o[0]
        C = real_wigner_3j(l1, l2, l3)
        alpha = math.sqrt(2 * l3 + 1)  # TODO(synk): approximate e3nn component/path normalization
        for u in range(mul):
            for m3 in range(2 * l3 + 1):
                col = so + u * (2 * l3 + 1) + m3
                widx[col] = w_off[t] + u
                for m1 in range(2 * l1 + 1):
                    for m2 in range(2 * l2 + 1):
                        row = (si + u * (2 * l1 + 1) + m1) * d_edge + (sj + m2)
                        Q[row, col] += alpha * C[m1, m2, m3]

    W_lin2, _ = build_fctp(rng, irreps_mid, A, irreps_out)
    W_alpha = np.zeros((d_mid * A, 1), np.float32)  # e3nn zero-inits alpha weights
    W1 = rng.standard_normal((num_basis, fc_hidden)).astype(np.float32)
    W2 = rng.standard_normal((fc_hidden, weight_numel)).astype(np.float32)

    d_mid_p = _round_up(d_mid, 128)   # lane-dense accumulator width

    # ---- repack for the fused kernels -------------------------------------
    # node-prep: one (A*d_in, d_out + d_in) matrix producing [sc | x1]
    Wsc_r = W_sc.reshape(d_in, A, d_out).transpose(1, 0, 2).reshape(A * d_in, d_out)
    Wlin1_r = W_lin1.reshape(d_in, A, d_in).transpose(1, 0, 2).reshape(A * d_in, d_in)
    Wnp = np.concatenate([Wsc_r, Wlin1_r], axis=1)

    # edge TP: one (d_edge*d_in, d_mid_p) matrix, edge-attr index major
    Q_r = Q.reshape(d_in, d_edge, d_mid).transpose(1, 0, 2).reshape(d_edge * d_in, d_mid)
    Q_p = np.zeros((d_edge * d_in, d_mid_p), np.float32)
    Q_p[:, :d_mid] = Q_r

    # radial MLP: 1/sqrt(num_basis), widx expansion, 1/sqrt(hidden) folded in
    W1s = W1 / math.sqrt(num_basis)
    W2e = W2[:, widx] / math.sqrt(fc_hidden)
    W2e_p = np.zeros((fc_hidden, d_mid_p), np.float32)
    W2e_p[:, :d_mid] = W2e

    # combine: lin2|alpha merged, attr-major rows, 1/sqrt(num_neighbors) folded
    Wc = np.concatenate([W_lin2, W_alpha], axis=1).reshape(d_mid, A, d_out + 1).transpose(1, 0, 2)
    Wc_p = np.zeros((A, d_mid_p, d_out + 1), np.float32)
    Wc_p[:, :d_mid, :] = Wc
    Wcomb = Wc_p.reshape(A * d_mid_p, d_out + 1) / math.sqrt(num_neighbors)

    return dict(
        d_in=d_in, d_out=d_out, d_mid=d_mid, d_mid_p=d_mid_p, d_edge=d_edge, A=A,
        Wnp=jnp.asarray(Wnp, _MXU_DTYPE),
        Q=jnp.asarray(Q_p, _MXU_DTYPE),
        Wcomb=jnp.asarray(Wcomb, _MXU_DTYPE),
        mask_sc=jnp.asarray(mask_sc, jnp.float32),
        W1=jnp.asarray(W1s, _MXU_DTYPE),
        W2exp=jnp.asarray(W2e_p, _MXU_DTYPE))


def build_gate(irreps_node, irreps_edge, irreps_hidden):
    irreps_scalars = [(mul, ir) for mul, ir in irreps_hidden
                      if ir[0] == 0 and tp_path_exists(irreps_node, irreps_edge, ir)]
    irreps_gated = [(mul, ir) for mul, ir in irreps_hidden
                    if ir[0] > 0 and tp_path_exists(irreps_node, irreps_edge, ir)]
    ir_g = (0, 1) if tp_path_exists(irreps_node, irreps_edge, (0, 1)) else (0, -1)
    assert ir_g == (0, 1)  # TODO(synk): 0o gates (tanh) not needed for this config
    irreps_gates = [(mul, ir_g) for mul, _ in irreps_gated]
    ds, ng, dg = irreps_dim(irreps_scalars), irreps_dim(irreps_gates), irreps_dim(irreps_gated)
    assert ds > 0 and ng > 0 and dg > 0
    smask = np.zeros((1, ds), np.float32)
    off = 0
    for mul, (_, p) in irreps_scalars:
        smask[0, off:off + mul] = 1.0 if p == 1 else 0.0  # 1 -> silu, 0 -> tanh
        off += mul
    Eg = np.zeros((ng, dg), np.float32)
    gidx, goff = 0, 0
    for mul, (l, _) in irreps_gated:
        dim = 2 * l + 1
        for u in range(mul):
            Eg[gidx, goff + u * dim:goff + (u + 1) * dim] = 1.0
            gidx += 1
        goff += mul * dim
    return dict(irreps_in=irreps_scalars + irreps_gates + irreps_gated,
                irreps_out=irreps_scalars + irreps_gated,
                ds=ds, ng=ng, dg=dg,
                smask=jnp.asarray(smask), Eg=jnp.asarray(Eg))


def build_network(*, seed, irreps_node_input, attr_mul, user_edge_irreps,
                  irreps_node_output, mul, layers, lmax, num_basis, fc_hidden,
                  num_neighbors):
    assert lmax == 2  # TODO(synk): SH evaluation is hardcoded for lmax=2
    rng = np.random.default_rng(seed)
    irreps_sh = [(1, (l, (-1) ** l)) for l in range(lmax + 1)]
    irreps_edge = list(user_edge_irreps) + irreps_sh
    irreps_hidden = [(mul, (l, p)) for l in range(lmax + 1) for p in (-1, 1)]
    irreps_node = list(irreps_node_input)
    layer_params = []
    for _ in range(layers):
        gate = build_gate(irreps_node, irreps_edge, irreps_hidden)
        conv = build_conv(rng, irreps_node, attr_mul, irreps_edge,
                          gate['irreps_in'], num_basis, fc_hidden, num_neighbors)
        layer_params.append((conv, gate))
        irreps_node = gate['irreps_out']
    conv = build_conv(rng, irreps_node, attr_mul, irreps_edge,
                      list(irreps_node_output), num_basis, fc_hidden, num_neighbors)
    layer_params.append((conv, None))
    return layer_params


# ----------------------------------------------------------------------------
# forward pass
# ----------------------------------------------------------------------------
def network_forward(layer_params, data, *, max_radius, num_graphs, num_nodes,
                    node_tile=256, edge_tile=256):
    pos = jnp.asarray(data['pos'], jnp.float32)
    x = jnp.asarray(data['node_input'], jnp.float32)
    node_attr = jnp.asarray(data['node_attr'], jnp.float32)
    eattr_user = jnp.asarray(data['edge_attr'], jnp.float32)
    edge_src = jnp.asarray(data['edge_index'][0], jnp.int32)
    edge_dst = jnp.asarray(data['edge_index'][1], jnp.int32)
    batch = jnp.asarray(data['batch'], jnp.int32)

    n = pos.shape[0]
    e = edge_src.shape[0]
    n_pad, tn = _pad_and_tile(n, node_tile)
    e_pad, te = _pad_and_tile(e, edge_tile)
    n_tiles_e = e_pad // te
    if n_tiles_e >= 2 and n_tiles_e % 2 == 1:   # make splittable across 2 cores
        e_pad += te
        n_tiles_e += 1
    splits = 2 if n_tiles_e >= 2 else 1          # v7x: one partial accumulator per core
    tiles_per = n_tiles_e // splits

    # ---- layer-invariant per-edge geometry, hoisted out of the layer loop ----
    nb = layer_params[0][0]['W1'].shape[0]
    vec = pos[edge_src] - pos[edge_dst]
    r2 = jnp.sum(vec * vec, axis=1, keepdims=True)
    r = jnp.sqrt(r2)
    # TODO(synk): zero-length edges use rsqrt(max(r^2,eps)), not torch norm/div
    inv = jax.lax.rsqrt(jnp.maximum(r2, 1e-24))
    u = vec * inv
    xn, yn, zn = u[:, 0:1], u[:, 1:2], u[:, 2:3]
    c1, c2, c3 = math.sqrt(3.0), math.sqrt(15.0), math.sqrt(5.0)
    # e3nn real spherical harmonics, normalize=True, normalization='component', lmax=2
    sh = jnp.concatenate([
        jnp.ones_like(xn), c1 * xn, c1 * yn, c1 * zn,
        c2 * xn * zn, c2 * xn * yn,
        c3 * (yn * yn - 0.5 * (xn * xn + zn * zn)),
        c2 * yn * zn, 0.5 * c2 * (zn * zn - xn * xn)], axis=1)
    edge_full = jnp.concatenate([eattr_user, sh], axis=1)          # [E, d_edge]
    step = max_radius / (nb + 1)
    centers = (jnp.arange(nb, dtype=jnp.float32) + 1.0) * step
    diff = (r - centers[None, :]) / step
    inside = jnp.logical_and(diff > -1.0, diff < 1.0)
    emb = jnp.where(inside, jnp.cos(0.5 * math.pi * diff), 0.0) * math.sqrt(float(nb))

    # padded edges get all-zero basis rows -> zero radial weights -> zero messages
    ef_p = _pad_rows(edge_full, e_pad)
    emb_p = _pad_rows(emb, e_pad)

    h = _pad_rows(x, n_pad)
    attr_p = _pad_rows(node_attr, n_pad)
    src_col = _pad_rows(edge_src, e_pad).reshape(e_pad, 1)
    dst_row = _pad_rows(edge_dst, e_pad).reshape(n_tiles_e, 1, te)
    batch_row = _pad_rows(batch, n_pad).reshape(n_pad // tn, 1, tn)

    a_mul = attr_p.shape[1]
    d_edge = ef_p.shape[1]

    for conv, gate in layer_params:
        hidden = conv['W1'].shape[1]
        sc, x1 = _node_prep_call(n_pad, tn, conv['d_in'], a_mul, conv['d_out'])(
            h, attr_p, conv['Wnp'])
        node_mid = _edge_conv_call(te, tiles_per, splits, n_pad, d_edge,
                                   conv['d_in'], conv['d_mid_p'], nb, hidden)(
            src_col, dst_row, ef_p, emb_p, x1,
            conv['W1'], conv['W2exp'], conv['Q'])
        if gate is None:
            h = _combine_call(n_pad, tn, splits, conv['d_mid_p'], a_mul, conv['d_out'])(
                node_mid, attr_p, sc, conv['Wcomb'], conv['mask_sc'])
        else:
            h = _combine_gate_call(n_pad, tn, splits, conv['d_mid_p'], a_mul,
                                   conv['d_out'], gate['ds'], gate['ng'], gate['dg'])(
                node_mid, attr_p, sc, conv['Wcomb'], conv['mask_sc'],
                gate['smask'], gate['Eg'])

    # pool_nodes=True: per-graph scatter-sum / sqrt(num_nodes)
    return _pool_call(n_pad, tn, h.shape[1], int(num_graphs),
                      float(1.0 / math.sqrt(num_nodes)))(batch_row, h)


# ----------------------------------------------------------------------------
if __name__ == "__main__":
    key = jax.random.PRNGKey(0)
    N, E, num_graphs = 16, 64, 2
    lmax, layers, mul = 2, 3, 8
    number_of_basis = 10
    max_radius = 2.0
    num_neighbors = 4.0
    num_nodes = 8.0
    irreps_node_input = ((4, (0, 1)),)    # "4x0e"
    attr_mul = 2                          # irreps_node_attr = "2x0e"
    user_edge_irreps = ((1, (0, 1)),)     # data['edge_attr'] irreps = "1x0e"
    irreps_node_output = ((2, (0, 1)),)   # "2x0e"

    k1, k2, k3, k4, k5, k6, k7 = jax.random.split(key, 7)
    pos = 0.6 * jax.random.normal(k1, (N, 3), jnp.float32)
    node_input = jax.random.normal(k2, (N, irreps_dim(irreps_node_input)), jnp.float32)
    node_attr = jax.random.normal(k3, (N, attr_mul), jnp.float32)
    edge_attr_in = jax.random.normal(k4, (E, irreps_dim(user_edge_irreps)), jnp.float32)
    per_graph = N // num_graphs
    edge_src = jax.random.randint(k5, (E,), 0, N, dtype=jnp.int32)
    offs = jax.random.randint(k6, (E,), 1, per_graph, dtype=jnp.int32)
    edge_dst = (edge_src // per_graph) * per_graph + (edge_src % per_graph + offs) % per_graph
    edge_index = jnp.stack([edge_src, edge_dst])
    batch = jnp.repeat(jnp.arange(num_graphs, dtype=jnp.int32), per_graph)

    # sanity check 1: Pallas index-built scatter-sum pooling vs XLA segment_sum
    # (integer-valued inputs so the check is exact regardless of MXU precision)
    x_chk = jax.random.randint(k7, (N, 2), -8, 8, dtype=jnp.int32).astype(jnp.float32)
    ref = jax.ops.segment_sum(x_chk, batch, num_segments=num_graphs) / math.sqrt(num_nodes)
    got = pool_nodes(batch, x_chk, num_graphs, num_nodes)
    np.testing.assert_allclose(np.asarray(got), np.asarray(ref), atol=1e-4, rtol=1e-4)

    layer_params = build_network(
        seed=0, irreps_node_input=irreps_node_input, attr_mul=attr_mul,
        user_edge_irreps=user_edge_irreps, irreps_node_output=irreps_node_output,
        mul=mul, layers=layers, lmax=lmax, num_basis=number_of_basis, fc_hidden=100,
        num_neighbors=num_neighbors)

    data = dict(pos=pos, node_input=node_input, node_attr=node_attr,
                edge_attr=edge_attr_in, edge_index=edge_index, batch=batch)

    # forward with the default (large) edge tile: single tile, splits=1
    out = network_forward(layer_params, data, max_radius=max_radius,
                          num_graphs=num_graphs, num_nodes=num_nodes,
                          node_tile=256, edge_tile=256)
    out = jax.block_until_ready(out)
    assert out.shape == (num_graphs, irreps_dim(irreps_node_output)), out.shape
    assert bool(jnp.all(jnp.isfinite(out)))

    # sanity check 2: tiling / 2-core-split self-consistency (multi-tile path)
    out_small = network_forward(layer_params, data, max_radius=max_radius,
                                num_graphs=num_graphs, num_nodes=num_nodes,
                                node_tile=256, edge_tile=16)
    out_small = jax.block_until_ready(out_small)
    np.testing.assert_allclose(np.asarray(out), np.asarray(out_small),
                               atol=5e-2, rtol=5e-2)

    print("KERNEL_OK")
</pallas_src>

<mosaic_0001>
module attributes {stable_mosaic.version = 11 : i64} {
  func.func @_pool_kernel(%arg0: i32, %arg1: memref<1x1x16xi32, #tpu.memory_space<vmem>>, %arg2: memref<16x2xf32, #tpu.memory_space<vmem>>, %arg3: memref<2x2xf32, #tpu.memory_space<vmem>>) attributes {dimension_semantics = [#tpu.dimension_semantics<arbitrary>], iteration_bounds = array<i64: 1>, scalar_prefetch = 0 : i64, scratch_operands = 0 : i64, tpu.core_type = #tpu.core_type<tc>, window_params = [{transform_indices = @transform_0, window_bounds = array<i64: 1, 1, 16>}, {transform_indices = @transform_1, window_bounds = array<i64: 16, 2>}, {pipeline_mode = #tpu.pipeline_mode<synchronous>, transform_indices = @transform_2, window_bounds = array<i64: 2, 2>}]} {
    %c0_i32 = arith.constant 0 : i32
    %0 = arith.cmpi eq, %arg0, %c0_i32 : i32
    %1 = arith.extui %0 : i1 to i32
    %c0_i32_0 = arith.constant 0 : i32
    %2 = arith.cmpi ne, %1, %c0_i32_0 : i32
    scf.if %2 {
      %cst_10 = arith.constant 0.000000e+00 : f32
      %17 = vector.broadcast %cst_10 : f32 to vector<2x2xf32>
      %c0_11 = arith.constant 0 : index
      %c0_12 = arith.constant 0 : index
      %18 = vector.load %arg3[%c0_11, %c0_12] : memref<2x2xf32, #tpu.memory_space<vmem>>, vector<2x2xf32>
      tpu.vector_store %arg3[%c0_11, %c0_12], %17 {strides = array<i32>} : memref<2x2xf32, #tpu.memory_space<vmem>>, vector<2x2xf32>,
    } else {
    }
    %c0 = arith.constant 0 : index
    %c0_1 = arith.constant 0 : index
    %c0_2 = arith.constant 0 : index
    %3 = vector.load %arg1[%c0, %c0_1, %c0_2] : memref<1x1x16xi32, #tpu.memory_space<vmem>>, vector<1x1x16xi32>
    %4 = vector.shape_cast %3 : vector<1x1x16xi32> to vector<1x16xi32>
    %5 = tpu.iota {dimensions = array<i32: 0>} : vector<2x16xi32>
    %6 = vector.broadcast %4 : vector<1x16xi32> to vector<2x16xi32>
    %7 = arith.cmpi eq, %5, %6 : vector<2x16xi32>
    %8 = arith.extui %7 : vector<2x16xi1> to vector<2x16xi32>
    %9 = arith.sitofp %8 : vector<2x16xi32> to vector<2x16xf32>
    %c0_3 = arith.constant 0 : index
    %c0_4 = arith.constant 0 : index
    %10 = vector.load %arg3[%c0_3, %c0_4] : memref<2x2xf32, #tpu.memory_space<vmem>>, vector<2x2xf32>
    %c0_5 = arith.constant 0 : index
    %c0_6 = arith.constant 0 : index
    %11 = vector.load %arg2[%c0_5, %c0_6] : memref<16x2xf32, #tpu.memory_space<vmem>>, vector<16x2xf32>
    %cst = arith.constant dense<0.000000e+00> : vector<2x2xf32>
    %12 = tpu.matmul %9, %11, %cst {dimension_numbers = #tpu.dot_dimension_numbers<[1], [0], [0], [1], [0, 0, 1, 1], [], []>} : vector<2x16xf32>, vector<16x2xf32>, vector<2x2xf32> -> vector<2x2xf32>
    %cst_7 = arith.constant 0.353553385 : f32
    %13 = vector.broadcast %cst_7 : f32 to vector<2x2xf32>
    %14 = arith.mulf %13, %12 : vector<2x2xf32>
    %15 = arith.addf %10, %14 : vector<2x2xf32>
    %c0_8 = arith.constant 0 : index
    %c0_9 = arith.constant 0 : index
    %16 = vector.load %arg3[%c0_8, %c0_9] : memref<2x2xf32, #tpu.memory_space<vmem>>, vector<2x2xf32>
    tpu.vector_store %arg3[%c0_8, %c0_9], %15 {strides = array<i32>} : memref<2x2xf32, #tpu.memory_space<vmem>>, vector<2x2xf32>,
    return
  }
  func.func @transform_0(%arg0: i32) -> (i32, i32, i32) {
    %c0_i32 = arith.constant 0 : i32
    %c0_i32_0 = arith.constant 0 : i32
    %c0_i32_1 = arith.constant 0 : i32
    return %arg0, %c0_i32, %c0_i32_0 : i32, i32, i32
  }
  func.func @transform_1(%arg0: i32) -> (i32, i32) {
    %c0_i32 = arith.constant 0 : i32
    %c0_i32_0 = arith.constant 0 : i32
    return %arg0, %c0_i32 : i32, i32
  }
  func.func @transform_2(%arg0: i32) -> (i32, i32) {
    %c0_i32 = arith.constant 0 : i32
    %c0_i32_0 = arith.constant 0 : i32
    %c0_i32_1 = arith.constant 0 : i32
    return %c0_i32, %c0_i32_0 : i32, i32
  }
}

</mosaic_0001>

<llo_original>
// kernel: tpu_custom_call.1
$region0: #{tpu_custom_call.1}
  #allocation0 [shape = 'u32[]', space=smem, size = 0x4, offset = 0x4, fixed_abs, tag = 'smem constant byte address 0x4 - core index']
  #allocation1 [shape = 'u32[144,128]{1,0:T(1,128)}', space=vmem, size = 0x12000, scoped, tag = 'internal scratch']
  %s0 = inlined_call_operand.vmem [shape: s32[1,1,16], index: 0, kind: input, shape index: {}]
  %s1 = inlined_call_operand.vmem [shape: f32[16,2], index: 1, kind: input, shape index: {}]
  %s2 = inlined_call_operand.hbm [shape: f32[2,2], index: 2, kind: output, shape index: {}]
  %s3 = sld [smem:[#allocation0]]
  $region22: #{tpu_custom_call.1} parent=0
    _
  %s5 = ssub.s32 1, %s3
  %s6 = scalar_select 0, %s5, %s3
  $region1: #{tpu_custom_call.1} parent=0
    #allocation2 [shape = 'u8[1024]{0}', space=vmem, size = 0x400, scoped, tag = 'output window, operand 0, single buffered']
    #allocation3 [shape = 's32[1]{0}', space=sflag, size = 0x4, scoped, tag = 'scoped memory for tpu_custom_call.1']
    %7 = vsyncpa [#allocation3], 0
    // Predicated region
    $region2: #{tpu_custom_call.1} parent=1 // pred_check
      _
    $region3: #{tpu_custom_call.1} parent=1 // pred_check_branch
      %9 = sbr.rel (0) target = $region5
    $region4: #{tpu_custom_call.1} parent=1 // pred_region
      _
    $region5: #{tpu_custom_call.1} parent=1 // pred_fallthru
      _
    // Predicated region
    $region6: #{tpu_custom_call.1} parent=1 // pred_check
      _
    $region7: #{tpu_custom_call.1} parent=1 // pred_check_branch
      %11 = sbr.rel (0) target = $region9
    $region8: #{tpu_custom_call.1} parent=1 // pred_region
      _
    $region9: #{tpu_custom_call.1} parent=1 // pred_fallthru
      _
    %p12 = scmp.eq.s32.totalorder 0, 0
    // Predicated region
    $region10: #{tpu_custom_call.1} parent=1 // pred_check
      %p13 = pneg %p12
    $region11: #{tpu_custom_call.1} parent=1 // pred_check_branch
      %15 = sbr.rel (%p13) target = $region13
    $region12: #{tpu_custom_call.1} parent=1 // pred_region
      %vm16 = vcmask 9216
      %17 = vst.msk [vmem:[#allocation2] sm:$0x3] %vm16, 0.0
    $region13: #{tpu_custom_call.1} parent=1 // pred_fallthru
      _
    %v18 = vld [vmem:[%s0] sm:$0x1]
    %v19 = vlaneseq
    %v20 = vshrl.u32 %v19, 7
    %v21 = vlaneseq
    %v22 = vshrl.u32 %v21, 7
    %v23 = vsub.s32 0, %v22
    %v24 = vrot.slane %v18, %v23
    %vm25 = vcmp.eq.s32.totalorder %v20, %v24
    %v26 = vsel %vm25, 1, 0
    %v27 = vcvt.s32.f32 %v26
    %v28 = vld [vmem:[#allocation2] sm:$0x3]
    %v29 = vld [vmem:[%s1] sm:$0xff]
    %v30 = vld [vmem:[%s1 + $0x8] sm:$0xff]
    %vm31 = vcmask 130048
    %v33 = vsel %vm31, %v27, 0
    %35 = vmatprep.subr.mxu0 0.0
    %36 = vmatpush1.msra.mxu0 %v29
    %37 = vmatprep.subr.mxu0 0.0
    %38 = vmatpush1.msra.mxu0 %v30
    %39 = vmatprep.subr.mxu0 0.0
    %40 = vmatpush1.msra.mxu0 0.0
    %41 = vmatprep.subr.mxu0 0.0
    %42 = vmatpush1.msra.mxu0 0.0
    %43 = vmatprep.subr.mxu0 0.0
    %44 = vmatpush1.msra.mxu0 0.0
    %45 = vmatprep.subr.mxu0 0.0
    %46 = vmatpush1.msra.mxu0 0.0
    %47 = vmatprep.subr.mxu0 0.0
    %48 = vmatpush1.msra.mxu0 0.0
    %49 = vmatprep.subr.mxu0 0.0
    %50 = vmatpush1.msra.mxu0 0.0
    %51 = vmatprep.subr.mxu0 0.0
    %52 = vmatpush1.msra.mxu0 0.0
    %53 = vmatprep.subr.mxu0 0.0
    %54 = vmatpush1.msra.mxu0 0.0
    %55 = vmatprep.subr.mxu0 0.0
    %56 = vmatpush1.msra.mxu0 0.0
    %57 = vmatprep.subr.mxu0 0.0
    %58 = vmatpush1.msra.mxu0 0.0
    %59 = vmatprep.subr.mxu0 0.0
    %60 = vmatpush1.msra.mxu0 0.0
    %61 = vmatprep.subr.mxu0 0.0
    %62 = vmatpush1.msra.mxu0 0.0
    %63 = vmatprep.subr.mxu0 0.0
    %64 = vmatpush1.msra.mxu0 0.0
    %65 = vmatprep.subr.mxu0 0.0
    %66 = vmatpush1.msra.mxu0 0.0
    %67 = vmatprep.subr.mxu0 0.0
    %68 = vmatpush1.msra.mxu0 0.0
    %69 = vmatprep.subr.mxu0 0.0
    %70 = vmatpush1.msra.mxu0 0.0
    %71 = vmatprep.subr.mxu0 0.0
    %72 = vmatpush1.msra.mxu0 0.0
    %73 = vmatprep.subr.mxu0 0.0
    %74 = vmatpush1.msra.mxu0 0.0
    %75 = vmatprep.subr.mxu0 0.0
    %76 = vmatpush1.msra.mxu0 0.0
    %77 = vmatprep.subr.mxu0 0.0
    %78 = vmatpush1.msra.mxu0 0.0
    %79 = vmatprep.subr.mxu0 0.0
    %80 = vmatpush1.msra.mxu0 0.0
    %81 = vmatprep.subr.mxu0 0.0
    %82 = vmatpush1.msra.mxu0 0.0
    %83 = vmatprep.subr.mxu0 0.0
    %84 = vmatpush1.msra.mxu0 0.0
    %85 = vmatprep.subr.mxu0 0.0
    %86 = vmatpush1.msra.mxu0 0.0
    %87 = vmatprep.subr.mxu0 0.0
    %88 = vmatpush1.msra.mxu0 0.0
    %89 = vmatprep.subr.mxu0 0.0
    %90 = vmatpush1.msra.mxu0 0.0
    %91 = vmatprep.subr.mxu0 0.0
    %92 = vmatpush1.msra.mxu0 0.0
    %93 = vmatprep.subr.mxu0 0.0
    %94 = vmatpush1.msra.mxu0 0.0
    %95 = vmatprep.subr.mxu0 0.0
    %96 = vmatpush1.msra.mxu0 0.0
    %97 = vmatprep.subr.mxu0 0.0
    %98 = vmatpush1.msra.mxu0 0.0
    %99 = vmatprep.mubr.f32.mxu0 0.0
    %100 = vmatmul.mubr.f32.gmra.mrb[0].mxu0 %v33
    %v101 = vpop.f32.mrb[0].mxu0
    %v102 = vadd.f32 0.0, %v101
    %v103 = vpop.f32.mrb[0].mxu0
    %104 = vdwg.mxu0
    %v105 = vmul.f32 %v102, 0.35355338
    %v106 = vadd.f32 %v28, %v105
    %vm107 = vcmask 9216
    %108 = vst.msk [vmem:[#allocation2] sm:$0x3] %vm107, %v106
    // Predicated region
    $region14: #{tpu_custom_call.1} parent=1 // pred_check
      _
    $region15: #{tpu_custom_call.1} parent=1 // pred_check_branch
      %110 = sbr.rel (0) target = $region17
    $region16: #{tpu_custom_call.1} parent=1 // pred_region
      %s112 = ssub.s32 32, 32
      %113 = vsyncadd [#allocation3], %s112
      %s115 = sshll.u32 [#allocation2], 4
      %s116 = int_to_ptr.vmem [resolvable:$true] %s115
      %118 = dma.vmem_to_hbm [thread:$0]  %s116, 32, %s2, [#allocation3]
    $region17: #{tpu_custom_call.1} parent=1 // pred_fallthru
      _
    // Predicated region
    $region18: #{tpu_custom_call.1} parent=1 // pred_check
      _
    $region19: #{tpu_custom_call.1} parent=1 // pred_check_branch
      %120 = sbr.rel (0) target = $region21
    $region20: #{tpu_custom_call.1} parent=1 // pred_region
      %121 = dma.done [#allocation3], 32
    $region21: #{tpu_custom_call.1} parent=1 // pred_fallthru
      _
    %122 = vsyncpa [#allocation3], 1

</llo_original>
